<compile_context>
chip_gen: v6e
topology: v6e:2x2x1
jax: 0.10.0
libtpu: 0.0.40
codegen_flags: <defaults>
</compile_context>

<pallas_src>
import math

import jax
import jax.numpy as jnp
from jax.experimental import pallas as pl
from jax.experimental.pallas import tpu as pltpu


def _round_up(x, m):
    return (x + m - 1) // m * m


# -----------------------------------------------------------------------------
# Kernel
# -----------------------------------------------------------------------------
def mlp_kernel(x_ref, w1_ref, b1_ref, w2_ref, b2_ref, o_ref, h_ref):
    """One (row-tile i, fc2-column-tile j) grid step.

    x_ref : (tm, Kp)  bf16   activations           (streamed per row tile i)
    w1_ref: (Kp, Np)  bf16   fc1 weight            (VMEM-resident)
    b1_ref: (1,  Np)  f32    fc1 bias              (VMEM-resident)
    w2_ref: (Np, tn)  bf16   fc2 weight column tile (streamed per j)
    b2_ref: (1,  tn)  f32    fc2 bias column tile
    o_ref : (tm, tn)  out dtype
    h_ref : (tm, Np)  bf16   fc1 activation cache  (scratch, reused over j)
    """
    # fc1 + bias + ReLU computed once per row tile (first fc2 column step).
    @pl.when(pl.program_id(1) == 0)
    def _():
        h = jnp.dot(x_ref[...], w1_ref[...], preferred_element_type=jnp.float32)
        h = jnp.maximum(h + b1_ref[...], 0.0)
        # dropout1 == identity (eval / inference mode)
        h_ref[...] = h.astype(h_ref.dtype)

    # fc2 column tile: bf16 MXU matmul with f32 accumulation + f32 bias epilogue.
    out = jnp.dot(h_ref[...], w2_ref[...], preferred_element_type=jnp.float32)
    o_ref[...] = (out + b2_ref[...]).astype(o_ref.dtype)


# -----------------------------------------------------------------------------
# Sizing helpers
# -----------------------------------------------------------------------------
def _vmem_limit_bytes():
    """~75% of physical VMEM, capped at 100 MiB.

    v5e/v6e (128 MiB physical) -> ~96 MiB; v7x (64 MiB per TC) -> 48 MiB.
    """
    cap = 64 * 1024 * 1024
    try:
        info = pltpu.get_tpu_info()
        cap = int(getattr(info, "vmem_capacity_bytes", cap)) or cap
    except Exception:
        pass
    return max(32 * 1024 * 1024, min(cap * 3 // 4, 100 * 1024 * 1024))


def _choose_row_tile(m, tm_max=512):
    """Row tile + padded row count: at most ~one tile of padded rows, and
    >= 2 row-grid steps when there is enough work (v7x megacore)."""
    m8 = _round_up(max(m, 1), 8)
    tm_max = max(8, _round_up(tm_max, 8))
    g = max(1, -(-m8 // tm_max))
    if g == 1 and m8 >= 512:
        g = 2  # split the M axis so both v7x TensorCores get work
    tm = _round_up(-(-m8 // g), 8)
    return tm, g * tm


def _choose_col_tile(kp, np_, tm, vmem_limit):
    """Largest 128-multiple divisor of Np whose steady-state VMEM footprint
    (resident w1/b1, double-buffered x/w2/b2/out tiles, h scratch) fits ~80%
    of the VMEM budget."""
    def footprint(tn):
        resident = 2 * kp * np_ + 4 * np_            # w1 (bf16) + b1 (f32)
        stream = 2 * (2 * tm * kp)                   # x tile (bf16), 2 buffers
        stream += 2 * (2 * np_ * tn + 4 * tn)        # w2 (bf16) + b2 (f32), 2 buffers
        stream += 2 * (4 * tm * tn)                  # out tile (f32), 2 buffers
        scratch = 2 * tm * np_                       # h scratch (bf16)
        return resident + stream + scratch

    budget = int(vmem_limit * 0.8)
    nblocks = np_ // 128
    for d in range(nblocks, 0, -1):
        if nblocks % d == 0 and footprint(d * 128) <= budget:
            return d * 128
    return 128


# -----------------------------------------------------------------------------
# Parameter prep (hoisted out of the per-call path)
# -----------------------------------------------------------------------------
def prepare_mlp_params(w1, b1, w2, b2):
    """Pad feature dims to 128 lanes and cast weights to bf16 ONCE.

    w1: [in_dim, out_dim]   (PyTorch fc1.weight transposed)
    b1: [out_dim]
    w2: [out_dim, out_dim]  (PyTorch fc2.weight transposed)
    b2: [out_dim]
    Zero padding is exact: padded hidden columns stay zero through bias+ReLU
    (b1 pad is zero) and contribute nothing through zero-padded w2 rows.
    """
    in_dim, out_dim = w1.shape
    kp = _round_up(in_dim, 128)
    np_ = _round_up(out_dim, 128)
    w1p = jnp.pad(w1, ((0, kp - in_dim), (0, np_ - out_dim))).astype(jnp.bfloat16)
    b1p = jnp.pad(b1, (0, np_ - out_dim)).astype(jnp.float32).reshape(1, np_)
    w2p = jnp.pad(w2, ((0, np_ - out_dim), (0, np_ - out_dim))).astype(jnp.bfloat16)
    b2p = jnp.pad(b2, (0, np_ - out_dim)).astype(jnp.float32).reshape(1, np_)
    return dict(w1=w1p, b1=b1p, w2=w2p, b2=b2p, in_dim=in_dim, out_dim=out_dim)


# -----------------------------------------------------------------------------
# Forward
# -----------------------------------------------------------------------------
def mlp_forward(x, params, *, tm=512, tn=None):
    """Fused MLP forward.  x: [..., in_dim] -> [..., out_dim]."""
    in_dim, out_dim = params["in_dim"], params["out_dim"]
    w1, b1, w2, b2 = params["w1"], params["b1"], params["w2"], params["b2"]
    kp, np_ = w1.shape

    lead_shape = x.shape[:-1]
    m = math.prod(lead_shape) if lead_shape else 1
    x2d = x.reshape(m, in_dim)
    out_dtype = x.dtype
    out_itemsize = jnp.dtype(out_dtype).itemsize

    vmem_limit = _vmem_limit_bytes()
    tm, mp = _choose_row_tile(m, tm)
    if tn is None:
        tn = _choose_col_tile(kp, np_, tm, vmem_limit)
    assert tn % 128 == 0 and np_ % tn == 0, (tn, np_)

    grid_m, grid_n = mp // tm, np_ // tn
    grid = (grid_m, grid_n)

    # Cast to bf16 first (halves the pad copy), then pad rows/K lanes.
    xp = jnp.pad(x2d.astype(jnp.bfloat16), ((0, mp - m), (0, kp - in_dim)))

    # Cost hint for the XLA scheduler (padded shapes, per-array itemsizes).
    w2_fetches = grid_m if grid_n > 1 else 1
    cost = pl.CostEstimate(
        flops=2 * mp * kp * np_ + 2 * mp * np_ * np_,
        transcendentals=0,
        bytes_accessed=(
            xp.size * xp.dtype.itemsize
            + w1.size * w1.dtype.itemsize + b1.size * b1.dtype.itemsize
            + (w2.size * w2.dtype.itemsize + b2.size * b2.dtype.itemsize) * w2_fetches
            + mp * np_ * out_itemsize
        ),
    )

    def build_specs(single_buffer_weights):
        def resident(shape, index_map):
            if single_buffer_weights:
                return pl.BlockSpec(shape, index_map,
                                    pipeline_mode=pl.Buffered(1))
            return pl.BlockSpec(shape, index_map)

        x_spec = pl.BlockSpec((tm, kp), lambda i, j: (i, 0))
        w1_spec = resident((kp, np_), lambda i, j: (0, 0))
        b1_spec = resident((1, np_), lambda i, j: (0, 0))
        if grid_n == 1:  # fc2 params are grid-invariant too
            w2_spec = resident((np_, tn), lambda i, j: (0, j))
            b2_spec = resident((1, tn), lambda i, j: (0, j))
        else:
            w2_spec = pl.BlockSpec((np_, tn), lambda i, j: (0, j))
            b2_spec = pl.BlockSpec((1, tn), lambda i, j: (0, j))
        out_spec = pl.BlockSpec((tm, tn), lambda i, j: (i, j))
        return [x_spec, w1_spec, b1_spec, w2_spec, b2_spec], out_spec

    def run(single_buffer_weights):
        in_specs, out_spec = build_specs(single_buffer_weights)
        return pl.pallas_call(
            mlp_kernel,
            out_shape=jax.ShapeDtypeStruct((mp, np_), out_dtype),
            grid=grid,
            in_specs=in_specs,
            out_specs=out_spec,
            scratch_shapes=[pltpu.VMEM((tm, np_), jnp.bfloat16)],
            compiler_params=pltpu.CompilerParams(
                dimension_semantics=("parallel", "arbitrary"),
                vmem_limit_bytes=vmem_limit,
            ),
            cost_estimate=cost,
        )(xp, w1, b1, w2, b2)

    try:
        out2d = run(True)
    except Exception:
        # Pallas version without pipeline_mode=pl.Buffered(1): fall back to the
        # default (double-buffered) weight specs — performance-only difference.
        out2d = run(False)

    return out2d[:m, :out_dim].reshape(*lead_shape, out_dim)


# -----------------------------------------------------------------------------
# Init + references
# -----------------------------------------------------------------------------
def init_mlp_params(key, in_dim, out_dim, dtype=jnp.float32):
    """Deterministic init mimicking nn.Linear's kaiming-uniform bounds.
    Weights are stored already transposed: [in, out]."""
    k1, k2, k3, k4 = jax.random.split(key, 4)
    bound1 = 1.0 / (in_dim ** 0.5)
    bound2 = 1.0 / (out_dim ** 0.5)
    w1 = jax.random.uniform(k1, (in_dim, out_dim), dtype, -bound1, bound1)
    b1 = jax.random.uniform(k2, (out_dim,), dtype, -bound1, bound1)
    w2 = jax.random.uniform(k3, (out_dim, out_dim), dtype, -bound2, bound2)
    b2 = jax.random.uniform(k4, (out_dim,), dtype, -bound2, bound2)
    return w1, b1, w2, b2


def _reference_f32(x, w1, b1, w2, b2):
    h = jnp.maximum(x @ w1 + b1, 0.0)
    return h @ w2 + b2


def _reference_bf16(x, w1, b1, w2, b2):
    """Same mixed precision as the kernel: bf16 MXU inputs, f32 accum/bias."""
    xb = x.astype(jnp.bfloat16)
    h = jnp.dot(xb, w1.astype(jnp.bfloat16), preferred_element_type=jnp.float32)
    h = jnp.maximum(h + b1, 0.0).astype(jnp.bfloat16)
    out = jnp.dot(h, w2.astype(jnp.bfloat16), preferred_element_type=jnp.float32)
    return out + b2


if __name__ == "__main__":
    key = jax.random.PRNGKey(0)
    k_x1, k_p1, k_x2, k_p2, k_x3, k_p3 = jax.random.split(key, 6)

    # Test 1: toy config of the module (in_dim = out_dim = 32), grid (1, 1).
    batch, seq, in_dim, out_dim = 2, 8, 32, 32
    x = jax.random.normal(k_x1, (batch, seq, in_dim), jnp.float32)
    w1, b1, w2, b2 = init_mlp_params(k_p1, in_dim, out_dim)
    params = prepare_mlp_params(w1, b1, w2, b2)
    out = jax.block_until_ready(mlp_forward(x, params))
    assert out.shape == (batch, seq, out_dim)
    ref_b = _reference_bf16(x, w1, b1, w2, b2)
    ref_f = _reference_f32(x, w1, b1, w2, b2)
    assert jnp.allclose(out, ref_b, atol=1e-2, rtol=1e-2), \
        float(jnp.max(jnp.abs(out - ref_b)))
    assert float(jnp.max(jnp.abs(out - ref_f))) < 0.1  # bf16-MXU vs f32 drift

    # Test 2: aligned shapes, multi-step grid on BOTH axes:
    # m=256 rows with tm=64 -> 4 row tiles; out_dim=256 with tn=128 -> 2 column tiles.
    batch2, seq2, in_dim2, out_dim2 = 4, 64, 128, 256
    x2 = jax.random.normal(k_x2, (batch2, seq2, in_dim2), jnp.float32)
    w1_2, b1_2, w2_2, b2_2 = init_mlp_params(k_p2, in_dim2, out_dim2)
    params2 = prepare_mlp_params(w1_2, b1_2, w2_2, b2_2)
    out2 = jax.block_until_ready(mlp_forward(x2, params2, tm=64, tn=128))
    assert out2.shape == (batch2, seq2, out_dim2)
    ref2 = _reference_bf16(x2, w1_2, b1_2, w2_2, b2_2)
    assert jnp.allclose(out2, ref2, atol=1e-2, rtol=1e-2), \
        float(jnp.max(jnp.abs(out2 - ref2)))

    # Test 3: awkward, unaligned dims (exercises the pad + slice path), auto tiles.
    batch3, seq3, in_dim3, out_dim3 = 3, 7, 48, 160
    x3 = jax.random.normal(k_x3, (batch3, seq3, in_dim3), jnp.float32)
    w1_3, b1_3, w2_3, b2_3 = init_mlp_params(k_p3, in_dim3, out_dim3)
    params3 = prepare_mlp_params(w1_3, b1_3, w2_3, b2_3)
    out3 = jax.block_until_ready(mlp_forward(x3, params3))
    assert out3.shape == (batch3, seq3, out_dim3)
    ref3 = _reference_bf16(x3, w1_3, b1_3, w2_3, b2_3)
    assert jnp.allclose(out3, ref3, atol=1e-2, rtol=1e-2), \
        float(jnp.max(jnp.abs(out3 - ref3)))

    print("KERNEL_OK")
</pallas_src>

<mosaic_0001>
module attributes {stable_mosaic.version = 11 : i64} {
  func.func @mlp_kernel(%arg0: i32, %arg1: i32, %arg2: memref<16x128xbf16, #tpu.memory_space<vmem>>, %arg3: memref<128x128xbf16, #tpu.memory_space<vmem>>, %arg4: memref<1x128xf32, #tpu.memory_space<vmem>>, %arg5: memref<128x128xbf16, #tpu.memory_space<vmem>>, %arg6: memref<1x128xf32, #tpu.memory_space<vmem>>, %arg7: memref<16x128xf32, #tpu.memory_space<vmem>>, %arg8: memref<16x128xbf16, #tpu.memory_space<vmem>>) attributes {dimension_semantics = [#tpu.dimension_semantics<parallel>, #tpu.dimension_semantics<arbitrary>], iteration_bounds = array<i64: 1, 1>, scalar_prefetch = 0 : i64, scratch_operands = 1 : i64, tpu.core_type = #tpu.core_type<tc>, window_params = [{transform_indices = @transform_0, window_bounds = array<i64: 16, 128>}, {pipeline_mode = #tpu.pipeline_mode<synchronous>, transform_indices = @transform_1, window_bounds = array<i64: 128, 128>}, {pipeline_mode = #tpu.pipeline_mode<synchronous>, transform_indices = @transform_2, window_bounds = array<i64: 1, 128>}, {pipeline_mode = #tpu.pipeline_mode<synchronous>, transform_indices = @transform_3, window_bounds = array<i64: 128, 128>}, {pipeline_mode = #tpu.pipeline_mode<synchronous>, transform_indices = @transform_4, window_bounds = array<i64: 1, 128>}, {transform_indices = @transform_5, window_bounds = array<i64: 16, 128>}]} {
    %c0_i32 = arith.constant 0 : i32
    %0 = arith.cmpi eq, %arg1, %c0_i32 : i32
    %1 = arith.extui %0 : i1 to i32
    %c0_i32_0 = arith.constant 0 : i32
    %2 = arith.cmpi ne, %1, %c0_i32_0 : i32
    scf.if %2 {
      %c0_8 = arith.constant 0 : index
      %c0_9 = arith.constant 0 : index
      %10 = vector.load %arg2[%c0_8, %c0_9] : memref<16x128xbf16, #tpu.memory_space<vmem>>, vector<16x128xbf16>
      %c0_10 = arith.constant 0 : index
      %c0_11 = arith.constant 0 : index
      %11 = vector.load %arg3[%c0_10, %c0_11] : memref<128x128xbf16, #tpu.memory_space<vmem>>, vector<128x128xbf16>
      %cst_12 = arith.constant dense<0.000000e+00> : vector<16x128xf32>
      %12 = tpu.matmul %10, %11, %cst_12 {dimension_numbers = #tpu.dot_dimension_numbers<[1], [0], [0], [1], [0, 0, 1, 1], [], []>} : vector<16x128xbf16>, vector<128x128xbf16>, vector<16x128xf32> -> vector<16x128xf32>
      %c0_13 = arith.constant 0 : index
      %c0_14 = arith.constant 0 : index
      %13 = vector.load %arg4[%c0_13, %c0_14] : memref<1x128xf32, #tpu.memory_space<vmem>>, vector<1x128xf32>
      %14 = vector.broadcast %13 : vector<1x128xf32> to vector<16x128xf32>
      %15 = arith.addf %12, %14 : vector<16x128xf32>
      %cst_15 = arith.constant 0.000000e+00 : f32
      %16 = vector.broadcast %cst_15 : f32 to vector<16x128xf32>
      %17 = arith.maximumf %15, %16 : vector<16x128xf32>
      %18 = arith.truncf %17 : vector<16x128xf32> to vector<16x128xbf16>
      %c0_16 = arith.constant 0 : index
      %c0_17 = arith.constant 0 : index
      %19 = vector.load %arg8[%c0_16, %c0_17] : memref<16x128xbf16, #tpu.memory_space<vmem>>, vector<16x128xbf16>
      tpu.vector_store %arg8[%c0_16, %c0_17], %18 {strides = array<i32>} : memref<16x128xbf16, #tpu.memory_space<vmem>>, vector<16x128xbf16>,
    } else {
    }
    %c0 = arith.constant 0 : index
    %c0_1 = arith.constant 0 : index
    %3 = vector.load %arg8[%c0, %c0_1] : memref<16x128xbf16, #tpu.memory_space<vmem>>, vector<16x128xbf16>
    %c0_2 = arith.constant 0 : index
    %c0_3 = arith.constant 0 : index
    %4 = vector.load %arg5[%c0_2, %c0_3] : memref<128x128xbf16, #tpu.memory_space<vmem>>, vector<128x128xbf16>
    %cst = arith.constant dense<0.000000e+00> : vector<16x128xf32>
    %5 = tpu.matmul %3, %4, %cst {dimension_numbers = #tpu.dot_dimension_numbers<[1], [0], [0], [1], [0, 0, 1, 1], [], []>} : vector<16x128xbf16>, vector<128x128xbf16>, vector<16x128xf32> -> vector<16x128xf32>
    %c0_4 = arith.constant 0 : index
    %c0_5 = arith.constant 0 : index
    %6 = vector.load %arg6[%c0_4, %c0_5] : memref<1x128xf32, #tpu.memory_space<vmem>>, vector<1x128xf32>
    %7 = vector.broadcast %6 : vector<1x128xf32> to vector<16x128xf32>
    %8 = arith.addf %5, %7 : vector<16x128xf32>
    %c0_6 = arith.constant 0 : index
    %c0_7 = arith.constant 0 : index
    %9 = vector.load %arg7[%c0_6, %c0_7] : memref<16x128xf32, #tpu.memory_space<vmem>>, vector<16x128xf32>
    tpu.vector_store %arg7[%c0_6, %c0_7], %8 {strides = array<i32>} : memref<16x128xf32, #tpu.memory_space<vmem>>, vector<16x128xf32>,
    return
  }
  func.func @transform_0(%arg0: i32, %arg1: i32) -> (i32, i32) {
    %c0_i32 = arith.constant 0 : i32
    %c0_i32_0 = arith.constant 0 : i32
    return %arg0, %c0_i32 : i32, i32
  }
  func.func @transform_1(%arg0: i32, %arg1: i32) -> (i32, i32) {
    %c0_i32 = arith.constant 0 : i32
    %c0_i32_0 = arith.constant 0 : i32
    %c0_i32_1 = arith.constant 0 : i32
    return %c0_i32, %c0_i32_0 : i32, i32
  }
  func.func @transform_2(%arg0: i32, %arg1: i32) -> (i32, i32) {
    %c0_i32 = arith.constant 0 : i32
    %c0_i32_0 = arith.constant 0 : i32
    %c0_i32_1 = arith.constant 0 : i32
    return %c0_i32, %c0_i32_0 : i32, i32
  }
  func.func @transform_3(%arg0: i32, %arg1: i32) -> (i32, i32) {
    %c0_i32 = arith.constant 0 : i32
    %c0_i32_0 = arith.constant 0 : i32
    return %c0_i32, %arg1 : i32, i32
  }
  func.func @transform_4(%arg0: i32, %arg1: i32) -> (i32, i32) {
    %c0_i32 = arith.constant 0 : i32
    %c0_i32_0 = arith.constant 0 : i32
    return %c0_i32, %arg1 : i32, i32
  }
  func.func @transform_5(%arg0: i32, %arg1: i32) -> (i32, i32) {
    %c0_i32 = arith.constant 0 : i32
    return %arg0, %arg1 : i32, i32
  }
}

module attributes {stable_mosaic.version = 11 : i64} {
  func.func @mlp_kernel(%arg0: i32, %arg1: i32, %arg2: memref<16x128xbf16, #tpu.memory_space<vmem>>, %arg3: memref<128x128xbf16, #tpu.memory_space<vmem>>, %arg4: memref<1x128xf32, #tpu.memory_space<vmem>>, %arg5: memref<128x128xbf16, #tpu.memory_space<vmem>>, %arg6: memref<1x128xf32, #tpu.memory_space<vmem>>, %arg7: memref<16x128xf32, #tpu.memory_space<vmem>>, %arg8: memref<16x128xbf16, #tpu.memory_space<vmem>>) attributes {dimension_semantics = [#tpu.dimension_semantics<parallel>, #tpu.dimension_semantics<arbitrary>], iteration_bounds = array<i64: 1, 1>, scalar_prefetch = 0 : i64, scratch_operands = 1 : i64, tpu.core_type = #tpu.core_type<tc>, window_params = [{transform_indices = @transform_0, window_bounds = array<i64: 16, 128>}, {pipeline_mode = #tpu.pipeline_mode<synchronous>, transform_indices = @transform_1, window_bounds = array<i64: 128, 128>}, {pipeline_mode = #tpu.pipeline_mode<synchronous>, transform_indices = @transform_2, window_bounds = array<i64: 1, 128>}, {transform_indices = @transform_3, window_bounds = array<i64: 128, 128>}, {transform_indices = @transform_4, window_bounds = array<i64: 1, 128>}, {transform_indices = @transform_5, window_bounds = array<i64: 16, 128>}]} {
    %c0_i32 = arith.constant 0 : i32
    %0 = arith.cmpi eq, %arg1, %c0_i32 : i32
    %1 = arith.extui %0 : i1 to i32
    %c0_i32_0 = arith.constant 0 : i32
    %2 = arith.cmpi ne, %1, %c0_i32_0 : i32
    scf.if %2 {
      %c0_8 = arith.constant 0 : index
      %c0_9 = arith.constant 0 : index
      %10 = vector.load %arg2[%c0_8, %c0_9] : memref<16x128xbf16, #tpu.memory_space<vmem>>, vector<16x128xbf16>
      %c0_10 = arith.constant 0 : index
      %c0_11 = arith.constant 0 : index
      %11 = vector.load %arg3[%c0_10, %c0_11] : memref<128x128xbf16, #tpu.memory_space<vmem>>, vector<128x128xbf16>
      %cst_12 = arith.constant dense<0.000000e+00> : vector<16x128xf32>
      %12 = tpu.matmul %10, %11, %cst_12 {dimension_numbers = #tpu.dot_dimension_numbers<[1], [0], [0], [1], [0, 0, 1, 1], [], []>} : vector<16x128xbf16>, vector<128x128xbf16>, vector<16x128xf32> -> vector<16x128xf32>
      %c0_13 = arith.constant 0 : index
      %c0_14 = arith.constant 0 : index
      %13 = vector.load %arg4[%c0_13, %c0_14] : memref<1x128xf32, #tpu.memory_space<vmem>>, vector<1x128xf32>
      %14 = vector.broadcast %13 : vector<1x128xf32> to vector<16x128xf32>
      %15 = arith.addf %12, %14 : vector<16x128xf32>
      %cst_15 = arith.constant 0.000000e+00 : f32
      %16 = vector.broadcast %cst_15 : f32 to vector<16x128xf32>
      %17 = arith.maximumf %15, %16 : vector<16x128xf32>
      %18 = arith.truncf %17 : vector<16x128xf32> to vector<16x128xbf16>
      %c0_16 = arith.constant 0 : index
      %c0_17 = arith.constant 0 : index
      %19 = vector.load %arg8[%c0_16, %c0_17] : memref<16x128xbf16, #tpu.memory_space<vmem>>, vector<16x128xbf16>
      tpu.vector_store %arg8[%c0_16, %c0_17], %18 {strides = array<i32>} : memref<16x128xbf16, #tpu.memory_space<vmem>>, vector<16x128xbf16>,
    } else {
    }
    %c0 = arith.constant 0 : index
    %c0_1 = arith.constant 0 : index
    %3 = vector.load %arg8[%c0, %c0_1] : memref<16x128xbf16, #tpu.memory_space<vmem>>, vector<16x128xbf16>
    %c0_2 = arith.constant 0 : index
    %c0_3 = arith.constant 0 : index
    %4 = vector.load %arg5[%c0_2, %c0_3] : memref<128x128xbf16, #tpu.memory_space<vmem>>, vector<128x128xbf16>
    %cst = arith.constant dense<0.000000e+00> : vector<16x128xf32>
    %5 = tpu.matmul %3, %4, %cst {dimension_numbers = #tpu.dot_dimension_numbers<[1], [0], [0], [1], [0, 0, 1, 1], [], []>} : vector<16x128xbf16>, vector<128x128xbf16>, vector<16x128xf32> -> vector<16x128xf32>
    %c0_4 = arith.constant 0 : index
    %c0_5 = arith.constant 0 : index
    %6 = vector.load %arg6[%c0_4, %c0_5] : memref<1x128xf32, #tpu.memory_space<vmem>>, vector<1x128xf32>
    %7 = vector.broadcast %6 : vector<1x128xf32> to vector<16x128xf32>
    %8 = arith.addf %5, %7 : vector<16x128xf32>
    %c0_6 = arith.constant 0 : index
    %c0_7 = arith.constant 0 : index
    %9 = vector.load %arg7[%c0_6, %c0_7] : memref<16x128xf32, #tpu.memory_space<vmem>>, vector<16x128xf32>
    tpu.vector_store %arg7[%c0_6, %c0_7], %8 {strides = array<i32>} : memref<16x128xf32, #tpu.memory_space<vmem>>, vector<16x128xf32>,
    return
  }
  func.func @transform_0(%arg0: i32, %arg1: i32) -> (i32, i32) {
    %c0_i32 = arith.constant 0 : i32
    %c0_i32_0 = arith.constant 0 : i32
    return %arg0, %c0_i32 : i32, i32
  }
  func.func @transform_1(%arg0: i32, %arg1: i32) -> (i32, i32) {
    %c0_i32 = arith.constant 0 : i32
    %c0_i32_0 = arith.constant 0 : i32
    %c0_i32_1 = arith.constant 0 : i32
    return %c0_i32, %c0_i32_0 : i32, i32
  }
  func.func @transform_2(%arg0: i32, %arg1: i32) -> (i32, i32) {
    %c0_i32 = arith.constant 0 : i32
    %c0_i32_0 = arith.constant 0 : i32
    %c0_i32_1 = arith.constant 0 : i32
    return %c0_i32, %c0_i32_0 : i32, i32
  }
  func.func @transform_3(%arg0: i32, %arg1: i32) -> (i32, i32) {
    %c0_i32 = arith.constant 0 : i32
    %c0_i32_0 = arith.constant 0 : i32
    return %c0_i32, %arg1 : i32, i32
  }
  func.func @transform_4(%arg0: i32, %arg1: i32) -> (i32, i32) {
    %c0_i32 = arith.constant 0 : i32
    %c0_i32_0 = arith.constant 0 : i32
    return %c0_i32, %arg1 : i32, i32
  }
  func.func @transform_5(%arg0: i32, %arg1: i32) -> (i32, i32) {
    %c0_i32 = arith.constant 0 : i32
    return %arg0, %arg1 : i32, i32
  }
}

</mosaic_0001>

<llo_original>
// kernel: tpu_custom_call.1
$region0: #{tpu_custom_call.1}
  #allocation0 [shape = 'u32[]', space=smem, size = 0x4, offset = 0x4, fixed_abs, tag = 'smem constant byte address 0x4 - core index']
  #allocation1 [shape = 'u32[144,128]{1,0:T(1,128)}', space=vmem, size = 0x12000, scoped, tag = 'internal scratch']
  #allocation2 [shape = 'bf16[16,128]{1,0:T(8,128)(2,1)}', space=vmem, size = 0x1000, scoped, tag = 'scratch operand']
  %s0 = inlined_call_operand.hbm [shape: bf16[16,128], index: 0, kind: input, shape index: {}]
  %s1 = inlined_call_operand.hbm [shape: bf16[128,128], index: 1, kind: input, shape index: {}]
  %s2 = inlined_call_operand.vmem [shape: f32[1,128], index: 2, kind: input, shape index: {}]
  %s3 = inlined_call_operand.hbm [shape: bf16[128,128], index: 3, kind: input, shape index: {}]
  %s4 = inlined_call_operand.vmem [shape: f32[1,128], index: 4, kind: input, shape index: {}]
  %s5 = inlined_call_operand.hbm [shape: f32[16,128], index: 5, kind: output, shape index: {}]
  %s6 = sld [smem:[#allocation0]]
  $region46: #{tpu_custom_call.1} parent=0
    _
  %s8 = ssub.s32 1, %s6
  %s9 = scalar_select 0, %s8, %s6
  $region1: #{tpu_custom_call.1} parent=0
    #allocation3 [shape = 'u8[4096]{0}', space=vmem, size = 0x1000, scoped, tag = 'input window, operand 0, single buffered']
    #allocation4 [shape = 's32[1]{0}', space=sflag, size = 0x4, scoped, tag = 'scoped memory for tpu_custom_call.1']
    #allocation5 [shape = 's32[1]{0}', space=sflag, size = 0x4, scoped, tag = 'scoped memory for tpu_custom_call.1']
    #allocation6 [shape = 'u8[32768]{0}', space=vmem, size = 0x8000, scoped, tag = 'input window, operand 1, single buffered']
    #allocation7 [shape = 's32[1]{0}', space=sflag, size = 0x4, scoped, tag = 'scoped memory for tpu_custom_call.1']
    #allocation8 [shape = 'u8[32768]{0}', space=vmem, size = 0x8000, scoped, tag = 'input window, operand 3, single buffered']
    #allocation9 [shape = 'u8[8192]{0}', space=vmem, size = 0x2000, scoped, tag = 'output window, operand 0, single buffered']
    %10 = vsyncpa [#allocation4], 0
    %11 = vsyncpa [#allocation7], 0
    %12 = vsyncpa [#allocation5], 0
    // Predicated region
    $region2: #{tpu_custom_call.1} parent=1 // pred_check
      _
    $region3: #{tpu_custom_call.1} parent=1 // pred_check_branch
      %14 = sbr.rel (0) target = $region5
    $region4: #{tpu_custom_call.1} parent=1 // pred_region
      %s16 = ssub.s32 128, 128
      %17 = vsyncadd [#allocation4], %s16
      %s18 = sshll.u32 [#allocation3], 4
      %s19 = int_to_ptr.vmem [resolvable:$true] %s18
      %24 = dma.hbm_to_vmem [thread:$0]  %s0, 128, %s19, [#allocation4], 64, 64, 4
    $region5: #{tpu_custom_call.1} parent=1 // pred_fallthru
      _
    // Predicated region
    $region6: #{tpu_custom_call.1} parent=1 // pred_check
      _
    $region7: #{tpu_custom_call.1} parent=1 // pred_check_branch
      %26 = sbr.rel (0) target = $region9
    $region8: #{tpu_custom_call.1} parent=1 // pred_region
      %s28 = ssub.s32 1024, 1024
      %29 = vsyncadd [#allocation7], %s28
      %s30 = sshll.u32 [#allocation6], 4
      %s31 = int_to_ptr.vmem [resolvable:$true] %s30
      %36 = dma.hbm_to_vmem [thread:$0]  %s1, 1024, %s31, [#allocation7], 64, 64, 4
    $region9: #{tpu_custom_call.1} parent=1 // pred_fallthru
      _
    // Predicated region
    $region10: #{tpu_custom_call.1} parent=1 // pred_check
      _
    $region11: #{tpu_custom_call.1} parent=1 // pred_check_branch
      %38 = sbr.rel (0) target = $region13
    $region12: #{tpu_custom_call.1} parent=1 // pred_region
      _
    $region13: #{tpu_custom_call.1} parent=1 // pred_fallthru
      _
    // Predicated region
    $region14: #{tpu_custom_call.1} parent=1 // pred_check
      _
    $region15: #{tpu_custom_call.1} parent=1 // pred_check_branch
      %40 = sbr.rel (0) target = $region17
    $region16: #{tpu_custom_call.1} parent=1 // pred_region
      %s42 = ssub.s32 1024, 1024
      %43 = vsyncadd [#allocation7], %s42
      %s44 = sshll.u32 [#allocation8], 4
      %s45 = int_to_ptr.vmem [resolvable:$true] %s44
      %50 = dma.hbm_to_vmem [thread:$0]  %s3, 1024, %s45, [#allocation7], 64, 64, 4
    $region17: #{tpu_custom_call.1} parent=1 // pred_fallthru
      _
    // Predicated region
    $region18: #{tpu_custom_call.1} parent=1 // pred_check
      _
    $region19: #{tpu_custom_call.1} parent=1 // pred_check_branch
      %52 = sbr.rel (0) target = $region21
    $region20: #{tpu_custom_call.1} parent=1 // pred_region
      _
    $region21: #{tpu_custom_call.1} parent=1 // pred_fallthru
      _
    // Predicated region
    $region22: #{tpu_custom_call.1} parent=1 // pred_check
      _
    $region23: #{tpu_custom_call.1} parent=1 // pred_check_branch
      %54 = sbr.rel (0) target = $region25
    $region24: #{tpu_custom_call.1} parent=1 // pred_region
      %55 = dma.done [#allocation4], 128
    $region25: #{tpu_custom_call.1} parent=1 // pred_fallthru
      _
    // Predicated region
    $region26: #{tpu_custom_call.1} parent=1 // pred_check
      _
    $region27: #{tpu_custom_call.1} parent=1 // pred_check_branch
      %57 = sbr.rel (0) target = $region29
    $region28: #{tpu_custom_call.1} parent=1 // pred_region
      %58 = dma.done [#allocation7], 1024
    $region29: #{tpu_custom_call.1} parent=1 // pred_fallthru
      _
    // Predicated region
    $region30: #{tpu_custom_call.1} parent=1 // pred_check
      _
    $region31: #{tpu_custom_call.1} parent=1 // pred_check_branch
      %60 = sbr.rel (0) target = $region33
    $region32: #{tpu_custom_call.1} parent=1 // pred_region
      %61 = dma.done [#allocation7], 1024
    $region33: #{tpu_custom_call.1} parent=1 // pred_fallthru
      _
    %p63 = scmp.eq.s32.totalorder 0, 0
    // Predicated region
    $region34: #{tpu_custom_call.1} parent=1 // pred_check
      %p64 = pneg %p63
    $region35: #{tpu_custom_call.1} parent=1 // pred_check_branch
      %66 = sbr.rel (%p64) target = $region37
    $region36: #{tpu_custom_call.1} parent=1 // pred_region
      %v67 = vld [vmem:[#allocation3] sm:$0xf]
      %v68 = vld [vmem:[#allocation3 + $0x4] sm:$0xf]
      %v69 = vld [vmem:[#allocation6] sm:$0xf]
      %v70 = vld [vmem:[#allocation6 + $0x4] sm:$0xf]
      %v71 = vld [vmem:[#allocation6 + $0x8] sm:$0xf]
      %v72 = vld [vmem:[#allocation6 + $0xc] sm:$0xf]
      %v73 = vld [vmem:[#allocation6 + $0x10] sm:$0xf]
      %v74 = vld [vmem:[#allocation6 + $0x14] sm:$0xf]
      %v75 = vld [vmem:[#allocation6 + $0x18] sm:$0xf]
      %v76 = vld [vmem:[#allocation6 + $0x1c] sm:$0xf]
      %v77 = vld [vmem:[#allocation6 + $0x20] sm:$0xf]
      %v78 = vld [vmem:[#allocation6 + $0x24] sm:$0xf]
      %v79 = vld [vmem:[#allocation6 + $0x28] sm:$0xf]
      %v80 = vld [vmem:[#allocation6 + $0x2c] sm:$0xf]
      %v81 = vld [vmem:[#allocation6 + $0x30] sm:$0xf]
      %v82 = vld [vmem:[#allocation6 + $0x34] sm:$0xf]
      %v83 = vld [vmem:[#allocation6 + $0x38] sm:$0xf]
      %v84 = vld [vmem:[#allocation6 + $0x3c] sm:$0xf]
      %v85 = vld [vmem:[%s2] sm:$0x1]
      %v87 = vlaneseq
      %v88 = vshrl.u32 %v87, 7
      %v89 = vsub.s32 0, %v88
      %v90 = vrot.slane %v85, %v89
      %v94 = vunpack.c.l.b16 %v67
      %v95 = vunpack.c.l.b16 %v68
      %v96 = vpack.c.b16 %v95, %v94
      %v114 = vunpack.c.l.b16 %v69
      %v115 = vunpack.c.l.b16 %v70
      %v116 = vunpack.c.l.b16 %v71
      %v117 = vunpack.c.l.b16 %v72
      %v118 = vunpack.c.l.b16 %v73
      %v119 = vunpack.c.l.b16 %v74
      %v120 = vunpack.c.l.b16 %v75
      %v121 = vunpack.c.l.b16 %v76
      %v122 = vunpack.c.l.b16 %v77
      %v123 = vunpack.c.l.b16 %v78
      %v124 = vunpack.c.l.b16 %v79
      %v125 = vunpack.c.l.b16 %v80
      %v126 = vunpack.c.l.b16 %v81
      %v127 = vunpack.c.l.b16 %v82
      %v128 = vunpack.c.l.b16 %v83
      %v129 = vunpack.c.l.b16 %v84
      %v130 = vpack.c.b16 %v115, %v114
      %v131 = vpack.c.b16 %v117, %v116
      %v132 = vpack.c.b16 %v119, %v118
      %v133 = vpack.c.b16 %v121, %v120
      %v134 = vpack.c.b16 %v123, %v122
      %v135 = vpack.c.b16 %v125, %v124
      %v136 = vpack.c.b16 %v127, %v126
      %v137 = vpack.c.b16 %v129, %v128
      %146 = vmatprep.subr.bf16.mxu0 0
      %147 = vmatpush1.bf16.msra.mxu0 %v137
      %148 = vmatprep.subr.bf16.mxu0 0
      %149 = vmatpush1.bf16.msra.mxu0 %v136
      %150 = vmatprep.subr.bf16.mxu0 0
      %151 = vmatpush1.bf16.msra.mxu0 %v135
      %152 = vmatprep.subr.bf16.mxu0 0
      %153 = vmatpush1.bf16.msra.mxu0 %v134
      %154 = vmatprep.subr.bf16.mxu0 0
      %155 = vmatpush1.bf16.msra.mxu0 %v133
      %156 = vmatprep.subr.bf16.mxu0 0
      %157 = vmatpush1.bf16.msra.mxu0 %v132
      %158 = vmatprep.subr.bf16.mxu0 0
      %159 = vmatpush1.bf16.msra.mxu0 %v131
      %160 = vmatprep.subr.bf16.mxu0 0
      %161 = vmatpush1.bf16.msra.mxu0 %v130
      %162 = vmatprep.subr.bf16.mxu0 0
      %163 = vmatpush2.bf16.msra.mxu0 0
      %164 = vmatprep.subr.bf16.mxu0 0
      %165 = vmatpush2.bf16.msra.mxu0 0
      %166 = vmatprep.subr.bf16.mxu0 0
      %167 = vmatpush2.bf16.msra.mxu0 0
      %168 = vmatprep.subr.bf16.mxu0 0
      %169 = vmatpush2.bf16.msra.mxu0 0
      %170 = vmatprep.subr.bf16.mxu0 0
      %171 = vmatpush2.bf16.msra.mxu0 0
      %172 = vmatprep.subr.bf16.mxu0 0
      %173 = vmatpush2.bf16.msra.mxu0 0
      %174 = vmatprep.subr.bf16.mxu0 0
      %175 = vmatpush2.bf16.msra.mxu0 0
      %176 = vmatprep.subr.bf16.mxu0 0
      %177 = vmatpush2.bf16.msra.mxu0 0
      %178 = vmatprep.mubr.bf16.mxu0 0
      %179 = vmatmul.mubr.bf16.gmra.mxu0 %v96
      %v180 = vpop.f32.mrf.mxu0
      %v181 = vadd.f32 %v90, %v180
      %v182 = vpop.f32.mrf.mxu0
      %v183 = vpop.f32.mrf.mxu0
      %v184 = vadd.f32 %v90, %v183
      %v185 = vpop.f32.mrf.mxu0
      %186 = vdwg.mxu0
      %v187 = vmax.f32 %v181, 0.0
      %v188 = vmax.f32 %v184, 0.0
      %v189 = vpack.c.bf16 %v188, %v187
      %v191 = vunpack.c.l.b16 %v189
      %v192 = vunpack.c.h.b16 %v189
      %v193 = vpack.c.b16 %v191, %v191
      %v194 = vpack.c.b16 %v192, %v192
      %197 = vst [vmem:[#allocation2] sm:$0xf] %v193
      %198 = vst [vmem:[#allocation2 + $0x4] sm:$0xf] %v194
    $region37: #{tpu_custom_call.1} parent=1 // pred_fallthru
      _
    %v199 = vld [vmem:[#allocation2] sm:$0xf]
    %v200 = vld [vmem:[#allocation2 + $0x4] sm:$0xf]
    %v201 = vld [vmem:[#allocation8] sm:$0xf]
    %v202 = vld [vmem:[#allocation8 + $0x4] sm:$0xf]
    %v203 = vld [vmem:[#allocation8 + $0x8] sm:$0xf]
    %v204 = vld [vmem:[#allocation8 + $0xc] sm:$0xf]
    %v205 = vld [vmem:[#allocation8 + $0x10] sm:$0xf]
    %v206 = vld [vmem:[#allocation8 + $0x14] sm:$0xf]
    %v207 = vld [vmem:[#allocation8 + $0x18] sm:$0xf]
    %v208 = vld [vmem:[#allocation8 + $0x1c] sm:$0xf]
    %v209 = vld [vmem:[#allocation8 + $0x20] sm:$0xf]
    %v210 = vld [vmem:[#allocation8 + $0x24] sm:$0xf]
    %v211 = vld [vmem:[#allocation8 + $0x28] sm:$0xf]
    %v212 = vld [vmem:[#allocation8 + $0x2c] sm:$0xf]
    %v213 = vld [vmem:[#allocation8 + $0x30] sm:$0xf]
    %v214 = vld [vmem:[#allocation8 + $0x34] sm:$0xf]
    %v215 = vld [vmem:[#allocation8 + $0x38] sm:$0xf]
    %v216 = vld [vmem:[#allocation8 + $0x3c] sm:$0xf]
    %v217 = vld [vmem:[%s4] sm:$0x1]
    %v219 = vlaneseq
    %v220 = vshrl.u32 %v219, 7
    %v221 = vsub.s32 0, %v220
    %v222 = vrot.slane %v217, %v221
    %v226 = vunpack.c.l.b16 %v199
    %v227 = vunpack.c.l.b16 %v200
    %v228 = vpack.c.b16 %v227, %v226
    %v246 = vunpack.c.l.b16 %v201
    %v247 = vunpack.c.l.b16 %v202
    %v248 = vunpack.c.l.b16 %v203
    %v249 = vunpack.c.l.b16 %v204
    %v250 = vunpack.c.l.b16 %v205
    %v251 = vunpack.c.l.b16 %v206
    %v252 = vunpack.c.l.b16 %v207
    %v253 = vunpack.c.l.b16 %v208
    %v254 = vunpack.c.l.b16 %v209
    %v255 = vunpack.c.l.b16 %v210
    %v256 = vunpack.c.l.b16 %v211
    %v257 = vunpack.c.l.b16 %v212
    %v258 = vunpack.c.l.b16 %v213
    %v259 = vunpack.c.l.b16 %v214
    %v260 = vunpack.c.l.b16 %v215
    %v261 = vunpack.c.l.b16 %v216
    %v262 = vpack.c.b16 %v247, %v246
    %v263 = vpack.c.b16 %v249, %v248
    %v264 = vpack.c.b16 %v251, %v250
    %v265 = vpack.c.b16 %v253, %v252
    %v266 = vpack.c.b16 %v255, %v254
    %v267 = vpack.c.b16 %v257, %v256
    %v268 = vpack.c.b16 %v259, %v258
    %v269 = vpack.c.b16 %v261, %v260
    %278 = vmatprep.subr.bf16.mxu0 0
    %279 = vmatpush1.bf16.msra.mxu0 %v269
    %280 = vmatprep.subr.bf16.mxu0 0
    %281 = vmatpush1.bf16.msra.mxu0 %v268
    %282 = vmatprep.subr.bf16.mxu0 0
    %283 = vmatpush1.bf16.msra.mxu0 %v267
    %284 = vmatprep.subr.bf16.mxu0 0
    %285 = vmatpush1.bf16.msra.mxu0 %v266
    %286 = vmatprep.subr.bf16.mxu0 0
    %287 = vmatpush1.bf16.msra.mxu0 %v265
    %288 = vmatprep.subr.bf16.mxu0 0
    %289 = vmatpush1.bf16.msra.mxu0 %v264
    %290 = vmatprep.subr.bf16.mxu0 0
    %291 = vmatpush1.bf16.msra.mxu0 %v263
    %292 = vmatprep.subr.bf16.mxu0 0
    %293 = vmatpush1.bf16.msra.mxu0 %v262
    %294 = vmatprep.subr.bf16.mxu0 0
    %295 = vmatpush2.bf16.msra.mxu0 0
    %296 = vmatprep.subr.bf16.mxu0 0
    %297 = vmatpush2.bf16.msra.mxu0 0
    %298 = vmatprep.subr.bf16.mxu0 0
    %299 = vmatpush2.bf16.msra.mxu0 0
    %300 = vmatprep.subr.bf16.mxu0 0
    %301 = vmatpush2.bf16.msra.mxu0 0
    %302 = vmatprep.subr.bf16.mxu0 0
    %303 = vmatpush2.bf16.msra.mxu0 0
    %304 = vmatprep.subr.bf16.mxu0 0
    %305 = vmatpush2.bf16.msra.mxu0 0
    %306 = vmatprep.subr.bf16.mxu0 0
    %307 = vmatpush2.bf16.msra.mxu0 0
    %308 = vmatprep.subr.bf16.mxu0 0
    %309 = vmatpush2.bf16.msra.mxu0 0
    %310 = vmatprep.mubr.bf16.mxu0 0
    %311 = vmatmul.mubr.bf16.gmra.mxu0 %v228
    %v312 = vpop.f32.mrf.mxu0
    %v313 = vadd.f32 %v222, %v312
    %v314 = vpop.f32.mrf.mxu0
    %v315 = vpop.f32.mrf.mxu0
    %v316 = vadd.f32 %v222, %v315
    %v317 = vpop.f32.mrf.mxu0
    %318 = vdwg.mxu0
    %319 = vst [vmem:[#allocation9] sm:$0xff] %v313
    %320 = vst [vmem:[#allocation9 + $0x8] sm:$0xff] %v316
    // Predicated region
    $region38: #{tpu_custom_call.1} parent=1 // pred_check
      _
    $region39: #{tpu_custom_call.1} parent=1 // pred_check_branch
      %322 = sbr.rel (0) target = $region41
    $region40: #{tpu_custom_call.1} parent=1 // pred_region
      %s324 = ssub.s32 256, 256
      %325 = vsyncadd [#allocation5], %s324
      %s326 = sshll.u32 [#allocation9], 4
      %s327 = int_to_ptr.vmem [resolvable:$true] %s326
      %332 = dma.vmem_to_hbm [thread:$0]  %s327, 256, %s5, [#allocation5], 128, 128, 8
    $region41: #{tpu_custom_call.1} parent=1 // pred_fallthru
      _
    // Predicated region
    $region42: #{tpu_custom_call.1} parent=1 // pred_check
      _
    $region43: #{tpu_custom_call.1} parent=1 // pred_check_branch
      %334 = sbr.rel (0) target = $region45
    $region44: #{tpu_custom_call.1} parent=1 // pred_region
      %335 = dma.done [#allocation5], 256
    $region45: #{tpu_custom_call.1} parent=1 // pred_fallthru
      _
    %336 = vsyncpa [#allocation4], 1
    %337 = vsyncpa [#allocation7], 1
    %338 = vsyncpa [#allocation5], 1

// kernel: tpu_custom_call.1
$region0: #{tpu_custom_call.1}
  #allocation0 [shape = 'u32[]', space=smem, size = 0x4, offset = 0x4, fixed_abs, tag = 'smem constant byte address 0x4 - core index']
  #allocation1 [shape = 'u32[144,128]{1,0:T(1,128)}', space=vmem, size = 0x12000, scoped, tag = 'internal scratch']
  #allocation2 [shape = 'bf16[16,128]{1,0:T(8,128)(2,1)}', space=vmem, size = 0x1000, scoped, tag = 'scratch operand']
  %s0 = inlined_call_operand.hbm [shape: bf16[16,128], index: 0, kind: input, shape index: {}]
  %s1 = inlined_call_operand.hbm [shape: bf16[128,128], index: 1, kind: input, shape index: {}]
  %s2 = inlined_call_operand.vmem [shape: f32[1,128], index: 2, kind: input, shape index: {}]
  %s3 = inlined_call_operand.hbm [shape: bf16[128,128], index: 3, kind: input, shape index: {}]
  %s4 = inlined_call_operand.vmem [shape: f32[1,128], index: 4, kind: input, shape index: {}]
  %s5 = inlined_call_operand.hbm [shape: f32[16,128], index: 5, kind: output, shape index: {}]
  %s6 = sld [smem:[#allocation0]]
  $region46: #{tpu_custom_call.1} parent=0
    _
  %s8 = ssub.s32 1, %s6
  %s9 = scalar_select 0, %s8, %s6
  $region1: #{tpu_custom_call.1} parent=0
    #allocation3 [shape = 'u8[4096]{0}', space=vmem, size = 0x1000, scoped, tag = 'input window, operand 0, single buffered']
    #allocation4 [shape = 's32[1]{0}', space=sflag, size = 0x4, scoped, tag = 'scoped memory for tpu_custom_call.1']
    #allocation5 [shape = 's32[1]{0}', space=sflag, size = 0x4, scoped, tag = 'scoped memory for tpu_custom_call.1']
    #allocation6 [shape = 'u8[32768]{0}', space=vmem, size = 0x8000, scoped, tag = 'input window, operand 1, single buffered']
    #allocation7 [shape = 's32[1]{0}', space=sflag, size = 0x4, scoped, tag = 'scoped memory for tpu_custom_call.1']
    #allocation8 [shape = 'u8[32768]{0}', space=vmem, size = 0x8000, scoped, tag = 'input window, operand 3, single buffered']
    #allocation9 [shape = 'u8[8192]{0}', space=vmem, size = 0x2000, scoped, tag = 'output window, operand 0, single buffered']
    %10 = vsyncpa [#allocation4], 0
    %11 = vsyncpa [#allocation7], 0
    %12 = vsyncpa [#allocation5], 0
    // Predicated region
    $region2: #{tpu_custom_call.1} parent=1 // pred_check
      _
    $region3: #{tpu_custom_call.1} parent=1 // pred_check_branch
      %14 = sbr.rel (0) target = $region5
    $region4: #{tpu_custom_call.1} parent=1 // pred_region
      %s16 = ssub.s32 128, 128
      %17 = vsyncadd [#allocation4], %s16
      %s18 = sshll.u32 [#allocation3], 4
      %s19 = int_to_ptr.vmem [resolvable:$true] %s18
      %24 = dma.hbm_to_vmem [thread:$0]  %s0, 128, %s19, [#allocation4], 64, 64, 4
    $region5: #{tpu_custom_call.1} parent=1 // pred_fallthru
      _
    // Predicated region
    $region6: #{tpu_custom_call.1} parent=1 // pred_check
      _
    $region7: #{tpu_custom_call.1} parent=1 // pred_check_branch
      %26 = sbr.rel (0) target = $region9
    $region8: #{tpu_custom_call.1} parent=1 // pred_region
      %s28 = ssub.s32 1024, 1024
      %29 = vsyncadd [#allocation7], %s28
      %s30 = sshll.u32 [#allocation6], 4
      %s31 = int_to_ptr.vmem [resolvable:$true] %s30
      %36 = dma.hbm_to_vmem [thread:$0]  %s1, 1024, %s31, [#allocation7], 64, 64, 4
    $region9: #{tpu_custom_call.1} parent=1 // pred_fallthru
      _
    // Predicated region
    $region10: #{tpu_custom_call.1} parent=1 // pred_check
      _
    $region11: #{tpu_custom_call.1} parent=1 // pred_check_branch
      %38 = sbr.rel (0) target = $region13
    $region12: #{tpu_custom_call.1} parent=1 // pred_region
      _
    $region13: #{tpu_custom_call.1} parent=1 // pred_fallthru
      _
    // Predicated region
    $region14: #{tpu_custom_call.1} parent=1 // pred_check
      _
    $region15: #{tpu_custom_call.1} parent=1 // pred_check_branch
      %40 = sbr.rel (0) target = $region17
    $region16: #{tpu_custom_call.1} parent=1 // pred_region
      %s42 = ssub.s32 1024, 1024
      %43 = vsyncadd [#allocation7], %s42
      %s44 = sshll.u32 [#allocation8], 4
      %s45 = int_to_ptr.vmem [resolvable:$true] %s44
      %50 = dma.hbm_to_vmem [thread:$0]  %s3, 1024, %s45, [#allocation7], 64, 64, 4
    $region17: #{tpu_custom_call.1} parent=1 // pred_fallthru
      _
    // Predicated region
    $region18: #{tpu_custom_call.1} parent=1 // pred_check
      _
    $region19: #{tpu_custom_call.1} parent=1 // pred_check_branch
      %52 = sbr.rel (0) target = $region21
    $region20: #{tpu_custom_call.1} parent=1 // pred_region
      _
    $region21: #{tpu_custom_call.1} parent=1 // pred_fallthru
      _
    // Predicated region
    $region22: #{tpu_custom_call.1} parent=1 // pred_check
      _
    $region23: #{tpu_custom_call.1} parent=1 // pred_check_branch
      %54 = sbr.rel (0) target = $region25
    $region24: #{tpu_custom_call.1} parent=1 // pred_region
      %55 = dma.done [#allocation4], 128
    $region25: #{tpu_custom_call.1} parent=1 // pred_fallthru
      _
    // Predicated region
    $region26: #{tpu_custom_call.1} parent=1 // pred_check
      _
    $region27: #{tpu_custom_call.1} parent=1 // pred_check_branch
      %57 = sbr.rel (0) target = $region29
    $region28: #{tpu_custom_call.1} parent=1 // pred_region
      %58 = dma.done [#allocation7], 1024
    $region29: #{tpu_custom_call.1} parent=1 // pred_fallthru
      _
    // Predicated region
    $region30: #{tpu_custom_call.1} parent=1 // pred_check
      _
    $region31: #{tpu_custom_call.1} parent=1 // pred_check_branch
      %60 = sbr.rel (0) target = $region33
    $region32: #{tpu_custom_call.1} parent=1 // pred_region
      %61 = dma.done [#allocation7], 1024
    $region33: #{tpu_custom_call.1} parent=1 // pred_fallthru
      _
    %p63 = scmp.eq.s32.totalorder 0, 0
    // Predicated region
    $region34: #{tpu_custom_call.1} parent=1 // pred_check
      %p64 = pneg %p63
    $region35: #{tpu_custom_call.1} parent=1 // pred_check_branch
      %66 = sbr.rel (%p64) target = $region37
    $region36: #{tpu_custom_call.1} parent=1 // pred_region
      %v67 = vld [vmem:[#allocation3] sm:$0xf]
      %v68 = vld [vmem:[#allocation3 + $0x4] sm:$0xf]
      %v69 = vld [vmem:[#allocation6] sm:$0xf]
      %v70 = vld [vmem:[#allocation6 + $0x4] sm:$0xf]
      %v71 = vld [vmem:[#allocation6 + $0x8] sm:$0xf]
      %v72 = vld [vmem:[#allocation6 + $0xc] sm:$0xf]
      %v73 = vld [vmem:[#allocation6 + $0x10] sm:$0xf]
      %v74 = vld [vmem:[#allocation6 + $0x14] sm:$0xf]
      %v75 = vld [vmem:[#allocation6 + $0x18] sm:$0xf]
      %v76 = vld [vmem:[#allocation6 + $0x1c] sm:$0xf]
      %v77 = vld [vmem:[#allocation6 + $0x20] sm:$0xf]
      %v78 = vld [vmem:[#allocation6 + $0x24] sm:$0xf]
      %v79 = vld [vmem:[#allocation6 + $0x28] sm:$0xf]
      %v80 = vld [vmem:[#allocation6 + $0x2c] sm:$0xf]
      %v81 = vld [vmem:[#allocation6 + $0x30] sm:$0xf]
      %v82 = vld [vmem:[#allocation6 + $0x34] sm:$0xf]
      %v83 = vld [vmem:[#allocation6 + $0x38] sm:$0xf]
      %v84 = vld [vmem:[#allocation6 + $0x3c] sm:$0xf]
      %v85 = vld [vmem:[%s2] sm:$0x1]
      %v87 = vlaneseq
      %v88 = vshrl.u32 %v87, 7
      %v89 = vsub.s32 0, %v88
      %v90 = vrot.slane %v85, %v89
      %v94 = vunpack.c.l.b16 %v67
      %v95 = vunpack.c.l.b16 %v68
      %v96 = vpack.c.b16 %v95, %v94
      %v114 = vunpack.c.l.b16 %v69
      %v115 = vunpack.c.l.b16 %v70
      %v116 = vunpack.c.l.b16 %v71
      %v117 = vunpack.c.l.b16 %v72
      %v118 = vunpack.c.l.b16 %v73
      %v119 = vunpack.c.l.b16 %v74
      %v120 = vunpack.c.l.b16 %v75
      %v121 = vunpack.c.l.b16 %v76
      %v122 = vunpack.c.l.b16 %v77
      %v123 = vunpack.c.l.b16 %v78
      %v124 = vunpack.c.l.b16 %v79
      %v125 = vunpack.c.l.b16 %v80
      %v126 = vunpack.c.l.b16 %v81
      %v127 = vunpack.c.l.b16 %v82
      %v128 = vunpack.c.l.b16 %v83
      %v129 = vunpack.c.l.b16 %v84
      %v130 = vpack.c.b16 %v115, %v114
      %v131 = vpack.c.b16 %v117, %v116
      %v132 = vpack.c.b16 %v119, %v118
      %v133 = vpack.c.b16 %v121, %v120
      %v134 = vpack.c.b16 %v123, %v122
      %v135 = vpack.c.b16 %v125, %v124
      %v136 = vpack.c.b16 %v127, %v126
      %v137 = vpack.c.b16 %v129, %v128
      %146 = vmatprep.subr.bf16.mxu0 0
      %147 = vmatpush1.bf16.msra.mxu0 %v137
      %148 = vmatprep.subr.bf16.mxu0 0
      %149 = vmatpush1.bf16.msra.mxu0 %v136
      %150 = vmatprep.subr.bf16.mxu0 0
      %151 = vmatpush1.bf16.msra.mxu0 %v135
      %152 = vmatprep.subr.bf16.mxu0 0
      %153 = vmatpush1.bf16.msra.mxu0 %v134
      %154 = vmatprep.subr.bf16.mxu0 0
      %155 = vmatpush1.bf16.msra.mxu0 %v133
      %156 = vmatprep.subr.bf16.mxu0 0
      %157 = vmatpush1.bf16.msra.mxu0 %v132
      %158 = vmatprep.subr.bf16.mxu0 0
      %159 = vmatpush1.bf16.msra.mxu0 %v131
      %160 = vmatprep.subr.bf16.mxu0 0
      %161 = vmatpush1.bf16.msra.mxu0 %v130
      %162 = vmatprep.subr.bf16.mxu0 0
      %163 = vmatpush2.bf16.msra.mxu0 0
      %164 = vmatprep.subr.bf16.mxu0 0
      %165 = vmatpush2.bf16.msra.mxu0 0
      %166 = vmatprep.subr.bf16.mxu0 0
      %167 = vmatpush2.bf16.msra.mxu0 0
      %168 = vmatprep.subr.bf16.mxu0 0
      %169 = vmatpush2.bf16.msra.mxu0 0
      %170 = vmatprep.subr.bf16.mxu0 0
      %171 = vmatpush2.bf16.msra.mxu0 0
      %172 = vmatprep.subr.bf16.mxu0 0
      %173 = vmatpush2.bf16.msra.mxu0 0
      %174 = vmatprep.subr.bf16.mxu0 0
      %175 = vmatpush2.bf16.msra.mxu0 0
      %176 = vmatprep.subr.bf16.mxu0 0
      %177 = vmatpush2.bf16.msra.mxu0 0
      %178 = vmatprep.mubr.bf16.mxu0 0
      %179 = vmatmul.mubr.bf16.gmra.mxu0 %v96
      %v180 = vpop.f32.mrf.mxu0
      %v181 = vadd.f32 %v90, %v180
      %v182 = vpop.f32.mrf.mxu0
      %v183 = vpop.f32.mrf.mxu0
      %v184 = vadd.f32 %v90, %v183
      %v185 = vpop.f32.mrf.mxu0
      %186 = vdwg.mxu0
      %v187 = vmax.f32 %v181, 0.0
      %v188 = vmax.f32 %v184, 0.0
      %v189 = vpack.c.bf16 %v188, %v187
      %v191 = vunpack.c.l.b16 %v189
      %v192 = vunpack.c.h.b16 %v189
      %v193 = vpack.c.b16 %v191, %v191
      %v194 = vpack.c.b16 %v192, %v192
      %197 = vst [vmem:[#allocation2] sm:$0xf] %v193
      %198 = vst [vmem:[#allocation2 + $0x4] sm:$0xf] %v194
    $region37: #{tpu_custom_call.1} parent=1 // pred_fallthru
      _
    %v199 = vld [vmem:[#allocation2] sm:$0xf]
    %v200 = vld [vmem:[#allocation2 + $0x4] sm:$0xf]
    %v201 = vld [vmem:[#allocation8] sm:$0xf]
    %v202 = vld [vmem:[#allocation8 + $0x4] sm:$0xf]
    %v203 = vld [vmem:[#allocation8 + $0x8] sm:$0xf]
    %v204 = vld [vmem:[#allocation8 + $0xc] sm:$0xf]
    %v205 = vld [vmem:[#allocation8 + $0x10] sm:$0xf]
    %v206 = vld [vmem:[#allocation8 + $0x14] sm:$0xf]
    %v207 = vld [vmem:[#allocation8 + $0x18] sm:$0xf]
    %v208 = vld [vmem:[#allocation8 + $0x1c] sm:$0xf]
    %v209 = vld [vmem:[#allocation8 + $0x20] sm:$0xf]
    %v210 = vld [vmem:[#allocation8 + $0x24] sm:$0xf]
    %v211 = vld [vmem:[#allocation8 + $0x28] sm:$0xf]
    %v212 = vld [vmem:[#allocation8 + $0x2c] sm:$0xf]
    %v213 = vld [vmem:[#allocation8 + $0x30] sm:$0xf]
    %v214 = vld [vmem:[#allocation8 + $0x34] sm:$0xf]
    %v215 = vld [vmem:[#allocation8 + $0x38] sm:$0xf]
    %v216 = vld [vmem:[#allocation8 + $0x3c] sm:$0xf]
    %v217 = vld [vmem:[%s4] sm:$0x1]
    %v219 = vlaneseq
    %v220 = vshrl.u32 %v219, 7
    %v221 = vsub.s32 0, %v220
    %v222 = vrot.slane %v217, %v221
    %v226 = vunpack.c.l.b16 %v199
    %v227 = vunpack.c.l.b16 %v200
    %v228 = vpack.c.b16 %v227, %v226
    %v246 = vunpack.c.l.b16 %v201
    %v247 = vunpack.c.l.b16 %v202
    %v248 = vunpack.c.l.b16 %v203
    %v249 = vunpack.c.l.b16 %v204
    %v250 = vunpack.c.l.b16 %v205
    %v251 = vunpack.c.l.b16 %v206
    %v252 = vunpack.c.l.b16 %v207
    %v253 = vunpack.c.l.b16 %v208
    %v254 = vunpack.c.l.b16 %v209
    %v255 = vunpack.c.l.b16 %v210
    %v256 = vunpack.c.l.b16 %v211
    %v257 = vunpack.c.l.b16 %v212
    %v258 = vunpack.c.l.b16 %v213
    %v259 = vunpack.c.l.b16 %v214
    %v260 = vunpack.c.l.b16 %v215
    %v261 = vunpack.c.l.b16 %v216
    %v262 = vpack.c.b16 %v247, %v246
    %v263 = vpack.c.b16 %v249, %v248
    %v264 = vpack.c.b16 %v251, %v250
    %v265 = vpack.c.b16 %v253, %v252
    %v266 = vpack.c.b16 %v255, %v254
    %v267 = vpack.c.b16 %v257, %v256
    %v268 = vpack.c.b16 %v259, %v258
    %v269 = vpack.c.b16 %v261, %v260
    %278 = vmatprep.subr.bf16.mxu0 0
    %279 = vmatpush1.bf16.msra.mxu0 %v269
    %280 = vmatprep.subr.bf16.mxu0 0
    %281 = vmatpush1.bf16.msra.mxu0 %v268
    %282 = vmatprep.subr.bf16.mxu0 0
    %283 = vmatpush1.bf16.msra.mxu0 %v267
    %284 = vmatprep.subr.bf16.mxu0 0
    %285 = vmatpush1.bf16.msra.mxu0 %v266
    %286 = vmatprep.subr.bf16.mxu0 0
    %287 = vmatpush1.bf16.msra.mxu0 %v265
    %288 = vmatprep.subr.bf16.mxu0 0
    %289 = vmatpush1.bf16.msra.mxu0 %v264
    %290 = vmatprep.subr.bf16.mxu0 0
    %291 = vmatpush1.bf16.msra.mxu0 %v263
    %292 = vmatprep.subr.bf16.mxu0 0
    %293 = vmatpush1.bf16.msra.mxu0 %v262
    %294 = vmatprep.subr.bf16.mxu0 0
    %295 = vmatpush2.bf16.msra.mxu0 0
    %296 = vmatprep.subr.bf16.mxu0 0
    %297 = vmatpush2.bf16.msra.mxu0 0
    %298 = vmatprep.subr.bf16.mxu0 0
    %299 = vmatpush2.bf16.msra.mxu0 0
    %300 = vmatprep.subr.bf16.mxu0 0
    %301 = vmatpush2.bf16.msra.mxu0 0
    %302 = vmatprep.subr.bf16.mxu0 0
    %303 = vmatpush2.bf16.msra.mxu0 0
    %304 = vmatprep.subr.bf16.mxu0 0
    %305 = vmatpush2.bf16.msra.mxu0 0
    %306 = vmatprep.subr.bf16.mxu0 0
    %307 = vmatpush2.bf16.msra.mxu0 0
    %308 = vmatprep.subr.bf16.mxu0 0
    %309 = vmatpush2.bf16.msra.mxu0 0
    %310 = vmatprep.mubr.bf16.mxu0 0
    %311 = vmatmul.mubr.bf16.gmra.mxu0 %v228
    %v312 = vpop.f32.mrf.mxu0
    %v313 = vadd.f32 %v222, %v312
    %v314 = vpop.f32.mrf.mxu0
    %v315 = vpop.f32.mrf.mxu0
    %v316 = vadd.f32 %v222, %v315
    %v317 = vpop.f32.mrf.mxu0
    %318 = vdwg.mxu0
    %319 = vst [vmem:[#allocation9] sm:$0xff] %v313
    %320 = vst [vmem:[#allocation9 + $0x8] sm:$0xff] %v316
    // Predicated region
    $region38: #{tpu_custom_call.1} parent=1 // pred_check
      _
    $region39: #{tpu_custom_call.1} parent=1 // pred_check_branch
      %322 = sbr.rel (0) target = $region41
    $region40: #{tpu_custom_call.1} parent=1 // pred_region
      %s324 = ssub.s32 256, 256
      %325 = vsyncadd [#allocation5], %s324
      %s326 = sshll.u32 [#allocation9], 4
      %s327 = int_to_ptr.vmem [resolvable:$true] %s326
      %332 = dma.vmem_to_hbm [thread:$0]  %s327, 256, %s5, [#allocation5], 128, 128, 8
    $region41: #{tpu_custom_call.1} parent=1 // pred_fallthru
      _
    // Predicated region
    $region42: #{tpu_custom_call.1} parent=1 // pred_check
      _
    $region43: #{tpu_custom_call.1} parent=1 // pred_check_branch
      %334 = sbr.rel (0) target = $region45
    $region44: #{tpu_custom_call.1} parent=1 // pred_region
      %335 = dma.done [#allocation5], 256
    $region45: #{tpu_custom_call.1} parent=1 // pred_fallthru
      _
    %336 = vsyncpa [#allocation4], 1
    %337 = vsyncpa [#allocation7], 1
    %338 = vsyncpa [#allocation5], 1

</llo_original>
